<compile_context>
chip_gen: v7x
topology: tpu7x:2x2x1
jax: 0.10.0
libtpu: 0.0.40
codegen_flags: <defaults>
</compile_context>

<pallas_src>
import math

import jax
import jax.numpy as jnp
from jax.experimental import pallas as pl
from jax.experimental.pallas import tpu as pltpu


def _round_up(x, m):
    return (x + m - 1) // m * m


def _vmem_capacity_bytes():
    # Generation-aware VMEM size (v7x: 64 MiB, v5e/v6e: 128 MiB); conservative fallback.
    try:
        return int(pltpu.get_tpu_info().vmem_capacity_bytes)
    except Exception:
        return 64 * 1024 * 1024


def _plan_tiles(M, Cin, KC, N, *, x_bytes, w_bytes, out_bytes, budget_bytes, lane_tile_cap):
    """Pick the KC (row) tile and the lane (spatial) tile.

    The VMEM accounting includes the weight/bias blocks AND their pipeline double buffers,
    the double-buffered x / out tiles, and the f32 accumulator.
    """
    # Row tile over KC = 8*Cout: keep it fully resident unless the layer is huge.
    tkc = KC if KC <= 1024 else 512                     # multiple of 8 either way (KC = 8*Cout)

    resident = 2 * tkc * (Cin * w_bytes + 4)            # double-buffered weight + bias blocks
    per_lane = 2 * Cin * x_bytes + 2 * tkc * out_bytes + tkc * 4   # x/out double buffers + f32 acc
    avail = max(budget_bytes - resident, 128 * per_lane)
    cap = max(128, min(lane_tile_cap, (avail // per_lane) // 128 * 128))

    if M <= 128:
        tn = M                                          # full-dim block (exempt from the 128 rule)
    else:
        tn = min(cap, _round_up(M, 128))
        if N == 1 and M >= 256:
            # Keep >= 2 spatial blocks so both TensorCores (v7x megacore) get grid work.
            tn = min(tn, _round_up((M + 1) // 2, 128))
    return tkc, tn


def _deconv_gemm_kernel(w_ref, b_ref, x_ref, o_ref):
    # (tkc, Cin) @ (Cin, tn) on the MXU with f32 accumulation, plus per-row bias.
    acc = jnp.dot(w_ref[...], x_ref[...], preferred_element_type=jnp.float32)
    o_ref[...] = (acc + b_ref[...]).astype(o_ref.dtype)


def single_deconv3d_block(x, weight, bias, *, out_dtype=None, packed_output=False,
                          lane_tile_cap=8192, vmem_limit_bytes=None):
    """ConvTranspose3d(kernel_size=2, stride=2, padding=0, output_padding=0).

    x:      (N, Cin, D, H, W)     activations (pass bf16 here to halve input HBM traffic)
    weight: (Cin, Cout, 2, 2, 2)  PyTorch ConvTranspose3d weight layout
    bias:   (Cout,)
    out_dtype:      output store dtype (default x.dtype); bf16 halves the dominant output stream.
    packed_output:  if True, return (N, Cout, 2, 2, 2, D, H, W) with
                    out[n,co,kd,kh,kw,d,h,w] == y[n,co,2d+kd,2h+kh,2w+kw] and no post-kernel pass,
                    so the consumer can fuse the interleave. Otherwise return NCDHW
                    (N, Cout, 2D, 2H, 2W) with one XLA transpose.
    """
    N, Cin, D, H, W = x.shape
    Cout = weight.shape[1]
    KC = 8 * Cout                        # 2*2*2 kernel positions x output channels
    M = D * H * W

    x_dtype = jnp.dtype(x.dtype)
    out_dtype = jnp.dtype(out_dtype) if out_dtype is not None else x_dtype

    vmem_cap = _vmem_capacity_bytes()
    if vmem_limit_bytes is None:
        vmem_limit_bytes = min(vmem_cap * 3 // 4, 96 * 1024 * 1024)
    budget_bytes = min(vmem_cap // 2, 64 * 1024 * 1024)

    # ---- tiny operand repack (weight/bias only; the big activation tensor is untouched) ----
    # Wp[(co,kd,kh,kw), ci] = weight[ci, co, kd, kh, kw]; cast to the activation dtype.
    w_packed = jnp.transpose(weight, (1, 2, 3, 4, 0)).reshape(KC, Cin).astype(x_dtype)
    b_packed = jnp.repeat(bias.astype(jnp.float32), 8).reshape(KC, 1)

    # x NCDHW -> (N, Cin, M): contiguous view; no transpose / pad / cast pass through HBM.
    x3 = x.reshape(N, Cin, M)

    tkc, tn = _plan_tiles(M, Cin, KC, N,
                          x_bytes=x_dtype.itemsize, w_bytes=x_dtype.itemsize,
                          out_bytes=out_dtype.itemsize,
                          budget_bytes=budget_bytes, lane_tile_cap=lane_tile_cap)

    # Ragged last blocks (M % tn != 0 or KC % tkc != 0) are masked by Pallas: garbage columns /
    # rows only feed masked-off output positions in this per-column, per-row GEMM.
    grid = (N, pl.cdiv(M, tn), pl.cdiv(KC, tkc))

    cost = pl.CostEstimate(
        flops=2 * N * M * Cin * KC,
        transcendentals=0,
        bytes_accessed=int(N * Cin * M * x_dtype.itemsize
                           + KC * Cin * x_dtype.itemsize
                           + N * KC * M * out_dtype.itemsize),
    )

    # TODO(synk): for very large Cin add a Cin grid axis with an f32 VMEM accumulator
    # (pl.when init/finalize); not needed for UNETR-style decoders (Cin <= ~1024).
    # Note: the weight/bias blocks are constant across the inner grid axes (and across kc when
    # KC <= 1024), so Pallas fetches them once; pl.Buffered(1) on those specs could reclaim the
    # second (idle) buffer but is not required for correctness.
    out_packed = pl.pallas_call(
        _deconv_gemm_kernel,
        out_shape=jax.ShapeDtypeStruct((N, KC, M), out_dtype),
        grid_spec=pltpu.PrefetchScalarGridSpec(
            num_scalar_prefetch=0,
            grid=grid,
            in_specs=[
                pl.BlockSpec((tkc, Cin), lambda n, j, kc: (kc, 0)),        # weight rows (resident)
                pl.BlockSpec((tkc, 1), lambda n, j, kc: (kc, 0)),          # bias rows   (resident)
                pl.BlockSpec((None, Cin, tn), lambda n, j, kc: (n, 0, j)),  # x tile (resident over kc)
            ],
            out_specs=pl.BlockSpec((None, tkc, tn), lambda n, j, kc: (n, kc, j)),
        ),
        compiler_params=pltpu.CompilerParams(
            dimension_semantics=("parallel", "parallel", "parallel"),
            vmem_limit_bytes=int(vmem_limit_bytes),
        ),
        cost_estimate=cost,
    )(w_packed, b_packed, x3)

    # (N, KC, M) -> (N, Cout, kd, kh, kw, D, H, W): contiguous view, zero HBM traffic.
    out8 = out_packed.reshape(N, Cout, 2, 2, 2, D, H, W)
    if packed_output:
        return out8

    # Interleave the 2x2x2 sub-blocks back into NCDHW. This is the single remaining extra pass
    # over the (8x-sized) output; use packed_output=True and fold this permute into the consumer
    # to remove it entirely.
    out = jnp.transpose(out8, (0, 1, 5, 2, 6, 3, 7, 4))    # (N, Cout, D, kd, H, kh, W, kw)
    return out.reshape(N, Cout, 2 * D, 2 * H, 2 * W)


def _reference(x, weight, bias):
    # Pure-JAX reference using the same exact no-overlap formulation.
    N, Cin, D, H, W = x.shape
    Cout = weight.shape[1]
    y = jnp.einsum("ncdhw,coijk->nodihjwk", x, weight)      # (N,Cout,D,kd,H,kh,W,kw)
    y = y + bias[None, :, None, None, None, None, None, None]
    return y.reshape(N, Cout, 2 * D, 2 * H, 2 * W)


if __name__ == "__main__":
    key = jax.random.PRNGKey(0)
    k_x, k_w, k_b = jax.random.split(key, 3)

    # Small shapes consistent with the module: batch=2, in_planes=4, out_planes=8, spatial=4.
    N, Cin, Cout, D, H, W = 2, 4, 8, 4, 4, 4

    x = jax.random.normal(k_x, (N, Cin, D, H, W), dtype=jnp.float32)
    fan = Cin * 8
    bound = 1.0 / math.sqrt(fan)
    weight = jax.random.uniform(k_w, (Cin, Cout, 2, 2, 2), jnp.float32, -bound, bound)
    bias = jax.random.uniform(k_b, (Cout,), jnp.float32, -bound, bound)

    ref = _reference(x, weight, bias)

    # Exact f32 path — matches the PyTorch module's numerics.
    out = jax.block_until_ready(single_deconv3d_block(x, weight, bias))
    assert out.shape == (N, Cout, 2 * D, 2 * H, 2 * W)
    assert jnp.allclose(out, ref, atol=1e-5, rtol=1e-5)

    # bf16 output stores: halves the dominant (8x-sized) output HBM stream.
    out_bf16 = jax.block_until_ready(
        single_deconv3d_block(x, weight, bias, out_dtype=jnp.bfloat16))
    assert jnp.allclose(out_bf16.astype(jnp.float32), ref, atol=5e-2, rtol=5e-2)

    # Packed layout (zero post-kernel traffic, for consumer fusion) must re-interleave to the same result.
    packed = jax.block_until_ready(
        single_deconv3d_block(x, weight, bias, packed_output=True))
    assert packed.shape == (N, Cout, 2, 2, 2, D, H, W)
    re_interleaved = jnp.transpose(packed, (0, 1, 5, 2, 6, 3, 7, 4)).reshape(ref.shape)
    assert jnp.allclose(re_interleaved, ref, atol=1e-5, rtol=1e-5)

    print("KERNEL_OK")
</pallas_src>

<mosaic_0001>
module attributes {stable_mosaic.version = 11 : i64} {
  func.func @_deconv_gemm_kernel(%arg0: i32, %arg1: i32, %arg2: i32, %arg3: memref<64x4xf32, #tpu.memory_space<vmem>>, %arg4: memref<64x1xf32, #tpu.memory_space<vmem>>, %arg5: memref<1x4x64xf32, #tpu.memory_space<vmem>>, %arg6: memref<1x64x64xf32, #tpu.memory_space<vmem>>) attributes {dimension_semantics = [#tpu.dimension_semantics<parallel>, #tpu.dimension_semantics<parallel>, #tpu.dimension_semantics<parallel>], iteration_bounds = array<i64: 2, 1, 1>, scalar_prefetch = 0 : i64, scratch_operands = 0 : i64, tpu.core_type = #tpu.core_type<tc>, window_params = [{transform_indices = @transform_0, window_bounds = array<i64: 64, 4>}, {transform_indices = @transform_1, window_bounds = array<i64: 64, 1>}, {transform_indices = @transform_2, window_bounds = array<i64: 1, 4, 64>}, {transform_indices = @transform_3, window_bounds = array<i64: 1, 64, 64>}]} {
    %c0 = arith.constant 0 : index
    %c0_0 = arith.constant 0 : index
    %0 = vector.load %arg3[%c0, %c0_0] : memref<64x4xf32, #tpu.memory_space<vmem>>, vector<64x4xf32>
    %c0_1 = arith.constant 0 : index
    %c0_2 = arith.constant 0 : index
    %c0_3 = arith.constant 0 : index
    %1 = vector.load %arg5[%c0_1, %c0_2, %c0_3] : memref<1x4x64xf32, #tpu.memory_space<vmem>>, vector<1x4x64xf32>
    %2 = vector.shape_cast %1 : vector<1x4x64xf32> to vector<4x64xf32>
    %cst = arith.constant dense<0.000000e+00> : vector<64x64xf32>
    %3 = tpu.matmul %0, %2, %cst {dimension_numbers = #tpu.dot_dimension_numbers<[1], [0], [0], [1], [0, 0, 1, 1], [], []>} : vector<64x4xf32>, vector<4x64xf32>, vector<64x64xf32> -> vector<64x64xf32>
    %c0_4 = arith.constant 0 : index
    %c0_5 = arith.constant 0 : index
    %4 = vector.load %arg4[%c0_4, %c0_5] : memref<64x1xf32, #tpu.memory_space<vmem>>, vector<64x1xf32>
    %5 = vector.broadcast %4 : vector<64x1xf32> to vector<64x64xf32>
    %6 = arith.addf %3, %5 : vector<64x64xf32>
    %c0_6 = arith.constant 0 : index
    %c0_7 = arith.constant 0 : index
    %c0_8 = arith.constant 0 : index
    %7 = vector.load %arg6[%c0_6, %c0_7, %c0_8] : memref<1x64x64xf32, #tpu.memory_space<vmem>>, vector<1x64x64xf32>
    %8 = vector.shape_cast %7 : vector<1x64x64xf32> to vector<64x64xf32>
    %9 = vector.shape_cast %6 : vector<64x64xf32> to vector<1x64x64xf32>
    tpu.vector_store %arg6[%c0_6, %c0_7, %c0_8], %9 {strides = array<i32>} : memref<1x64x64xf32, #tpu.memory_space<vmem>>, vector<1x64x64xf32>,
    return
  }
  func.func @transform_0(%arg0: i32, %arg1: i32, %arg2: i32) -> (i32, i32) {
    %c0_i32 = arith.constant 0 : i32
    %c0_i32_0 = arith.constant 0 : i32
    return %arg2, %c0_i32 : i32, i32
  }
  func.func @transform_1(%arg0: i32, %arg1: i32, %arg2: i32) -> (i32, i32) {
    %c0_i32 = arith.constant 0 : i32
    %c0_i32_0 = arith.constant 0 : i32
    return %arg2, %c0_i32 : i32, i32
  }
  func.func @transform_2(%arg0: i32, %arg1: i32, %arg2: i32) -> (i32, i32, i32) {
    %c0_i32 = arith.constant 0 : i32
    %c0_i32_0 = arith.constant 0 : i32
    return %arg0, %c0_i32, %arg1 : i32, i32, i32
  }
  func.func @transform_3(%arg0: i32, %arg1: i32, %arg2: i32) -> (i32, i32, i32) {
    %c0_i32 = arith.constant 0 : i32
    return %arg0, %arg2, %arg1 : i32, i32, i32
  }
}

</mosaic_0001>

<llo_original>
// kernel: tpu_custom_call.1
$region0: #{tpu_custom_call.1}
  #allocation0 [shape = 'u32[]', space=smem, size = 0x4, offset = 0x4, fixed_abs, tag = 'smem constant byte address 0x4 - core index']
  #allocation1 [shape = 'u32[144,128]{1,0:T(1,128)}', space=vmem, size = 0x12000, scoped, tag = 'internal scratch']
  %s0 = inlined_call_operand.vmem [shape: f32[64,4], index: 0, kind: input, shape index: {}]
  %s1 = inlined_call_operand.vmem [shape: f32[64,1], index: 1, kind: input, shape index: {}]
  %s2 = inlined_call_operand.vmem [shape: f32[2,4,64], index: 2, kind: input, shape index: {}]
  %s3 = inlined_call_operand.hbm [shape: f32[2,64,64], index: 3, kind: output, shape index: {}]
  %s4 = sld [smem:[#allocation0]]
  $region45: #{tpu_custom_call.1} parent=0
    _
  %s6 = ssub.s32 1, %s4
  %s7 = scalar_select 0, %s6, %s4
  $region1: #{tpu_custom_call.1} parent=0
    #allocation2 [shape = 'u8[65536]{0}', space=vmem, size = 0x10000, scoped, tag = 'output window, operand 0']
    #allocation3 [shape = 's32[2]{0}', space=sflag, size = 0x8, scoped, tag = 'scoped memory for tpu_custom_call.1']
    %8 = vsyncpa [#allocation3], 0
    %s9 = scalar_lea.sflag [#allocation3], 1
    %10 = vsyncpa %s9, 0
    loop: start=0, step=1, limit=4
    $region2: #{tpu_custom_call.1} parent=1 // loop_pre_header
      _
    $region3: #{tpu_custom_call.1} parent=1 // loop_header
      %s12 = sphi 0, %s16
      %p13 = scmp.ge.s32.totalorder %s12, 4
      %s19 = sphi 0, %s38
      %s20 = sphi 0, %s34
      %s21 = sphi 0, %s30
      %s22 = sphi 0, %s19
      %s23 = sphi 0, %s20
      %s24 = sphi 0, %s21
      %s25 = sphi 0, %s22
      %s26 = sphi 0, %s23
      %s27 = sphi 0, %s24
      %s41 = sphi 0, %s43
      %s44 = sphi 0, %s41
      %s45 = sphi 0, %s44
      %s61 = sphi 0, %s45
      %s67 = sphi 0, %s69
      %s70 = sphi 0, %s67
      %s71 = sphi 0, %s70
      %s87 = sphi 0, %s71
      %s95 = sphi 0, %s97
      %s98 = sphi 0, %s95
      %s99 = sphi 0, %s98
      %s115 = sphi 0, %s99
      %s125 = sphi 0, %s127
      %s128 = sphi 0, %s125
      %s129 = sphi 0, %s128
      %s145 = sphi 0, %s129
    $region4: #{tpu_custom_call.1} parent=1 // loop_header_branch
      %15 = sbr.rel (%p13) target = $region8
    $region5: #{tpu_custom_call.1} parent=1 // loop_body
      %s17 = ssub.s32 %s12, 1
      %s18 = ssub.s32 %s12, 2
      %s28 = sadd.s32 1, %s21
      %p29 = scmp.ge.s32.totalorder %s28, 1
      %s30 = scalar_select %p29, 0, %s28
      %s31 = sadd.s32 1, %s20
      %s32 = scalar_select %p29, %s31, %s20
      %p33 = scmp.ge.s32.totalorder %s32, 1
      %s34 = scalar_select %p33, 0, %s32
      %s35 = sadd.s32 1, %s19
      %s36 = scalar_select %p33, %s35, %s19
      %p37 = scmp.ge.s32.totalorder %s36, 2
      %s38 = scalar_select %p37, 0, %s36
      %s39 = ssub.s32 %s21, %s30
      %p40 = scmp.eq.s32.totalorder %s39, 0
      %s42 = sadd.s32 %s41, 1
      %s43 = scalar_select %p40, %s41, %s42
      %p46 = pneg %p40
      %p47 = scmp.eq.s32.totalorder %s12, 1
      %p48 = por %p46, %p47
      %p49 = scmp.ne.s32.totalorder %s41, %s44
      %p50 = scmp.eq.s32.totalorder %s12, 0
      %p51 = por %p49, %p50
      %p52 = scmp.ne.s32.totalorder %s41, %s44
      %p53 = scmp.eq.s32.totalorder %s17, 1
      %p54 = por %p52, %p53
      %p55 = scmp.ne.s32.totalorder %s44, %s45
      %p56 = scmp.eq.s32.totalorder %s17, 0
      %p57 = por %p55, %p56
      %p58 = scmp.ne.s32.totalorder %s44, %s45
      %p59 = scmp.eq.s32.totalorder %s18, 1
      %p60 = por %p58, %p59
      %p62 = scmp.ne.s32.totalorder %s45, %s61
      %p63 = scmp.eq.s32.totalorder %s18, 0
      %p64 = por %p62, %p63
      %s65 = ssub.s32 %s21, %s30
      %p66 = scmp.eq.s32.totalorder %s65, 0
      %s68 = sadd.s32 %s67, 1
      %s69 = scalar_select %p66, %s67, %s68
      %p72 = pneg %p66
      %p73 = scmp.eq.s32.totalorder %s12, 1
      %p74 = por %p72, %p73
      %p75 = scmp.ne.s32.totalorder %s67, %s70
      %p76 = scmp.eq.s32.totalorder %s12, 0
      %p77 = por %p75, %p76
      %p78 = scmp.ne.s32.totalorder %s67, %s70
      %p79 = scmp.eq.s32.totalorder %s17, 1
      %p80 = por %p78, %p79
      %p81 = scmp.ne.s32.totalorder %s70, %s71
      %p82 = scmp.eq.s32.totalorder %s17, 0
      %p83 = por %p81, %p82
      %p84 = scmp.ne.s32.totalorder %s70, %s71
      %p85 = scmp.eq.s32.totalorder %s18, 1
      %p86 = por %p84, %p85
      %p88 = scmp.ne.s32.totalorder %s71, %s87
      %p89 = scmp.eq.s32.totalorder %s18, 0
      %p90 = por %p88, %p89
      %s91 = ssub.s32 %s19, %s38
      %s92 = ssub.s32 %s20, %s34
      %s93 = sor.u32 %s91, %s92
      %p94 = scmp.eq.s32.totalorder %s93, 0
      %s96 = sadd.s32 %s95, 1
      %s97 = scalar_select %p94, %s95, %s96
      %p100 = pneg %p94
      %p101 = scmp.eq.s32.totalorder %s12, 1
      %p102 = por %p100, %p101
      %p103 = scmp.ne.s32.totalorder %s95, %s98
      %p104 = scmp.eq.s32.totalorder %s12, 0
      %p105 = por %p103, %p104
      %p106 = scmp.ne.s32.totalorder %s95, %s98
      %p107 = scmp.eq.s32.totalorder %s17, 1
      %p108 = por %p106, %p107
      %p109 = scmp.ne.s32.totalorder %s98, %s99
      %p110 = scmp.eq.s32.totalorder %s17, 0
      %p111 = por %p109, %p110
      %p112 = scmp.ne.s32.totalorder %s98, %s99
      %p113 = scmp.eq.s32.totalorder %s18, 1
      %p114 = por %p112, %p113
      %p116 = scmp.ne.s32.totalorder %s99, %s115
      %p117 = scmp.eq.s32.totalorder %s18, 0
      %p118 = por %p116, %p117
      %s119 = ssub.s32 %s19, %s38
      %s120 = ssub.s32 %s21, %s30
      %s121 = sor.u32 %s119, %s120
      %s122 = ssub.s32 %s20, %s34
      %s123 = sor.u32 %s121, %s122
      %p124 = scmp.eq.s32.totalorder %s123, 0
      %s126 = sadd.s32 %s125, 1
      %s127 = scalar_select %p124, %s125, %s126
      %p130 = pneg %p124
      %p131 = scmp.eq.s32.totalorder %s12, 1
      %p132 = por %p130, %p131
      %p133 = scmp.ne.s32.totalorder %s125, %s128
      %p134 = scmp.eq.s32.totalorder %s12, 0
      %p135 = por %p133, %p134
      %p136 = scmp.ne.s32.totalorder %s125, %s128
      %p137 = scmp.eq.s32.totalorder %s17, 1
      %p138 = por %p136, %p137
      %p139 = scmp.ne.s32.totalorder %s128, %s129
      %p140 = scmp.eq.s32.totalorder %s17, 0
      %p141 = por %p139, %p140
      %p142 = scmp.ne.s32.totalorder %s128, %s129
      %p143 = scmp.eq.s32.totalorder %s18, 1
      %p144 = por %p142, %p143
      %p146 = scmp.ne.s32.totalorder %s129, %s145
      %p147 = scmp.eq.s32.totalorder %s18, 0
      %p148 = por %p146, %p147
      %p149 = scmp.le.s32.totalorder 1, %s12
      %p150 = scmp.lt.s32.totalorder %s12, 3
      %p151 = pnand %p149, %p150
      %p152 = pneg %p151
      // Predicated region
      $region9: #{tpu_custom_call.1} parent=5 // pred_check
        _
      $region10: #{tpu_custom_call.1} parent=5 // pred_check_branch
        %154 = sbr.rel (%p151) target = $region12
      $region11: #{tpu_custom_call.1} parent=5 // pred_region
        %s155 = ssub.s32 %s12, 1
        // Predicated region
        $region13: #{tpu_custom_call.1} parent=11 // pred_check
          %p156 = pneg %p57
        $region14: #{tpu_custom_call.1} parent=11 // pred_check_branch
          %158 = sbr.rel (%p156) target = $region16
        $region15: #{tpu_custom_call.1} parent=11 // pred_region
          %s159 = smul.u32 8, %s24
          %p160 = scmp.lt.s32.totalorder %s159, 7
          %s161 = scalar_select %p160, %s159, 7
          %s162 = smul.addr %s161, 8
          %s163 = scalar_lea.vmem %s0, %s162
          %s164 = smul.u32 8, %s24
        $region16: #{tpu_custom_call.1} parent=11 // pred_fallthru
          _
        // Predicated region
        $region17: #{tpu_custom_call.1} parent=11 // pred_check
          %p165 = pneg %p83
        $region18: #{tpu_custom_call.1} parent=11 // pred_check_branch
          %167 = sbr.rel (%p165) target = $region20
        $region19: #{tpu_custom_call.1} parent=11 // pred_region
          %s168 = smul.u32 8, %s24
          %p169 = scmp.lt.s32.totalorder %s168, 7
          %s170 = scalar_select %p169, %s168, 7
          %s171 = smul.addr %s170, 8
          %s172 = scalar_lea.vmem %s1, %s171
          %s173 = smul.u32 8, %s24
        $region20: #{tpu_custom_call.1} parent=11 // pred_fallthru
          _
      $region12: #{tpu_custom_call.1} parent=5 // pred_fallthru
        _
      %p174 = scmp.lt.s32.totalorder %s12, 2
      // Predicated region
      $region21: #{tpu_custom_call.1} parent=5 // pred_check
        %p175 = pneg %p174
      $region22: #{tpu_custom_call.1} parent=5 // pred_check_branch
        %177 = sbr.rel (%p175) target = $region24
      $region23: #{tpu_custom_call.1} parent=5 // pred_region
        // Predicated region
        $region25: #{tpu_custom_call.1} parent=23 // pred_check
          %p178 = pneg %p105
        $region26: #{tpu_custom_call.1} parent=23 // pred_check_branch
          %180 = sbr.rel (%p178) target = $region28
        $region27: #{tpu_custom_call.1} parent=23 // pred_region
          %p181 = scmp.lt.s32.totalorder %s19, 1
          %s182 = scalar_select %p181, %s19, 1
          %p183 = scmp.lt.s32.totalorder %s20, 0
          %s184 = scalar_select %p183, %s20, 0
          %s185 = sadd.s32 %s184, %s182
          %s186 = smul.addr %s185, 4
          %s187 = scalar_lea.vmem %s2, %s186
        $region28: #{tpu_custom_call.1} parent=23 // pred_fallthru
          _
      $region24: #{tpu_custom_call.1} parent=5 // pred_fallthru
        _
      %p188 = scmp.le.s32.totalorder 1, %s12
      %p189 = scmp.lt.s32.totalorder %s12, 3
      %p190 = pnand %p188, %p189
      %p191 = pneg %p190
      // Predicated region
      $region29: #{tpu_custom_call.1} parent=5 // pred_check
        _
      $region30: #{tpu_custom_call.1} parent=5 // pred_check_branch
        %193 = sbr.rel (%p190) target = $region32
      $region31: #{tpu_custom_call.1} parent=5 // pred_region
        %s194 = ssub.s32 %s12, 1
        %s195 = smul.u32 8, %s24
        %p196 = scmp.lt.s32.totalorder %s195, 7
        %s197 = scalar_select %p196, %s195, 7
        %s198 = smul.addr %s197, 8
        %s199 = scalar_lea.vmem %s0, %s198
        %p200 = pneg %p57
        %p201 = pneg %p54
        %s202 = smul.u32 8, %s24
        %p203 = scmp.lt.s32.totalorder %s202, 7
        %s204 = scalar_select %p203, %s202, 7
        %s205 = smul.addr %s204, 8
        %s206 = scalar_lea.vmem %s1, %s205
        %p207 = pneg %p83
        %p208 = pneg %p80
        %p209 = scmp.lt.s32.totalorder %s22, 1
        %s210 = scalar_select %p209, %s22, 1
        %p211 = scmp.lt.s32.totalorder %s23, 0
        %s212 = scalar_select %p211, %s23, 0
        %s213 = sadd.s32 %s212, %s210
        %s214 = smul.addr %s213, 4
        %s215 = scalar_lea.vmem %s2, %s214
        %p216 = pneg %p111
        %p217 = pneg %p108
        %p218 = pneg %p141
        %p219 = pneg %p138
        %s220 = sand.u32 %s128, 1
        %s221 = scalar_lea.sflag [#allocation3], %s220
        %s222 = sand.u32 %s128, 1
        %s223 = smul.addr %s222, 64
        %s224 = scalar_lea.vmem [#allocation2], %s223
        %s225 = smul.u32 8, %s24
        %p226 = scmp.lt.s32.totalorder %s225, 7
        %s227 = scalar_select %p226, %s225, 7
        %s228 = smul.addr %s227, 8
        %s229 = scalar_lea.vmem %s0, %s228
        %s230 = smul.u32 8, %s24
        %s231 = smul.u32 8, %s24
        %p232 = scmp.lt.s32.totalorder %s231, 7
        %s233 = scalar_select %p232, %s231, 7
        %s234 = smul.addr %s233, 8
        %s235 = scalar_lea.vmem %s1, %s234
        %s236 = smul.u32 8, %s24
        %p237 = scmp.lt.s32.totalorder %s22, 1
        %s238 = scalar_select %p237, %s22, 1
        %p239 = scmp.lt.s32.totalorder %s23, 0
        %s240 = scalar_select %p239, %s23, 0
        %s241 = sadd.s32 %s240, %s238
        %s242 = smul.addr %s241, 4
        %s243 = scalar_lea.vmem %s2, %s242
        %s244 = smul.u32 8, %s24
        %v245 = vld [vmem:[%s229] sm:$0xff]
        %v246 = vld [vmem:[%s229 + $0x8] sm:$0xff]
        %v247 = vld [vmem:[%s229 + $0x10] sm:$0xff]
        %v248 = vld [vmem:[%s229 + $0x18] sm:$0xff]
        %v249 = vld [vmem:[%s229 + $0x20] sm:$0xff]
        %v250 = vld [vmem:[%s229 + $0x28] sm:$0xff]
        %v251 = vld [vmem:[%s229 + $0x30] sm:$0xff]
        %v252 = vld [vmem:[%s229 + $0x38] sm:$0xff]
        %v253 = vld [vmem:[%s243] sm:$0xf]
        %v254 = vld [vmem:[%s235] sm:$0xff]
        %v255 = vld [vmem:[%s235 + $0x8] sm:$0xff]
        %v256 = vld [vmem:[%s235 + $0x10] sm:$0xff]
        %v257 = vld [vmem:[%s235 + $0x18] sm:$0xff]
        %v258 = vld [vmem:[%s235 + $0x20] sm:$0xff]
        %v259 = vld [vmem:[%s235 + $0x28] sm:$0xff]
        %v260 = vld [vmem:[%s235 + $0x30] sm:$0xff]
        %v261 = vld [vmem:[%s235 + $0x38] sm:$0xff]
        %263 = vset.pattern.permute.xlu0 0
        %264 = vperm.xlu0 %263, %v254
        %v265 = vpop.permute.xlu0 %264
        %268 = vset.pattern.permute.xlu0 0
        %269 = vperm.xlu0 %268, %v255
        %v270 = vpop.permute.xlu0 %269
        %273 = vset.pattern.permute.xlu0 0
        %274 = vperm.xlu0 %273, %v256
        %v275 = vpop.permute.xlu0 %274
        %278 = vset.pattern.permute.xlu0 0
        %279 = vperm.xlu0 %278, %v257
        %v280 = vpop.permute.xlu0 %279
        %283 = vset.pattern.permute.xlu0 0
        %284 = vperm.xlu0 %283, %v258
        %v285 = vpop.permute.xlu0 %284
        %288 = vset.pattern.permute.xlu0 0
        %289 = vperm.xlu0 %288, %v259
        %v290 = vpop.permute.xlu0 %289
        %293 = vset.pattern.permute.xlu0 0
        %294 = vperm.xlu0 %293, %v260
        %v295 = vpop.permute.xlu0 %294
        %298 = vset.pattern.permute.xlu0 0
        %299 = vperm.xlu0 %298, %v261
        %v300 = vpop.permute.xlu0 %299
        %vm302 = vcmask 31744
        %v304 = vsel %vm302, %v245, 0
        %v307 = vsel %vm302, %v246, 0
        %v310 = vsel %vm302, %v247, 0
        %v313 = vsel %vm302, %v248, 0
        %v316 = vsel %vm302, %v249, 0
        %v319 = vsel %vm302, %v250, 0
        %v322 = vsel %vm302, %v251, 0
        %v325 = vsel %vm302, %v252, 0
        %vm327 = vcmask 1043456
        %v329 = vsel %vm327, %v253, 0
        %331 = vmatprep.subr.mxu0 0.0
        %332 = vmatpush1.msra.mxu0 %v329
        %333 = vmatprep.subr.mxu0 0.0
        %334 = vmatpush1.msra.mxu0 0.0
        %335 = vmatprep.subr.mxu0 0.0
        %336 = vmatpush1.msra.mxu0 0.0
        %337 = vmatprep.subr.mxu0 0.0
        %338 = vmatpush1.msra.mxu0 0.0
        %339 = vmatprep.subr.mxu0 0.0
        %340 = vmatpush1.msra.mxu0 0.0
        %341 = vmatprep.subr.mxu0 0.0
        %342 = vmatpush1.msra.mxu0 0.0
        %343 = vmatprep.subr.mxu0 0.0
        %344 = vmatpush1.msra.mxu0 0.0
        %345 = vmatprep.subr.mxu0 0.0
        %346 = vmatpush1.msra.mxu0 0.0
        %347 = vmatprep.subr.mxu0 0.0
        %348 = vmatpush1.msra.mxu0 0.0
        %349 = vmatprep.subr.mxu0 0.0
        %350 = vmatpush1.msra.mxu0 0.0
        %351 = vmatprep.subr.mxu0 0.0
        %352 = vmatpush1.msra.mxu0 0.0
        %353 = vmatprep.subr.mxu0 0.0
        %354 = vmatpush1.msra.mxu0 0.0
        %355 = vmatprep.subr.mxu0 0.0
        %356 = vmatpush1.msra.mxu0 0.0
        %357 = vmatprep.subr.mxu0 0.0
        %358 = vmatpush1.msra.mxu0 0.0
        %359 = vmatprep.subr.mxu0 0.0
        %360 = vmatpush1.msra.mxu0 0.0
        %361 = vmatprep.subr.mxu0 0.0
        %362 = vmatpush1.msra.mxu0 0.0
        %363 = vmatprep.subr.mxu0 0.0
        %364 = vmatpush1.msra.mxu0 0.0
        %365 = vmatprep.subr.mxu0 0.0
        %366 = vmatpush1.msra.mxu0 0.0
        %367 = vmatprep.subr.mxu0 0.0
        %368 = vmatpush1.msra.mxu0 0.0
        %369 = vmatprep.subr.mxu0 0.0
        %370 = vmatpush1.msra.mxu0 0.0
        %371 = vmatprep.subr.mxu0 0.0
        %372 = vmatpush1.msra.mxu0 0.0
        %373 = vmatprep.subr.mxu0 0.0
        %374 = vmatpush1.msra.mxu0 0.0
        %375 = vmatprep.subr.mxu0 0.0
        %376 = vmatpush1.msra.mxu0 0.0
        %377 = vmatprep.subr.mxu0 0.0
        %378 = vmatpush1.msra.mxu0 0.0
        %379 = vmatprep.subr.mxu0 0.0
        %380 = vmatpush1.msra.mxu0 0.0
        %381 = vmatprep.subr.mxu0 0.0
        %382 = vmatpush1.msra.mxu0 0.0
        %383 = vmatprep.subr.mxu0 0.0
        %384 = vmatpush1.msra.mxu0 0.0
        %385 = vmatprep.subr.mxu0 0.0
        %386 = vmatpush1.msra.mxu0 0.0
        %387 = vmatprep.subr.mxu0 0.0
        %388 = vmatpush1.msra.mxu0 0.0
        %389 = vmatprep.subr.mxu0 0.0
        %390 = vmatpush1.msra.mxu0 0.0
        %391 = vmatprep.subr.mxu0 0.0
        %392 = vmatpush1.msra.mxu0 0.0
        %393 = vmatprep.subr.mxu0 0.0
        %394 = vmatpush1.msra.mxu0 0.0
        %395 = vmatprep.mubr.f32.mxu0 0.0
        %396 = vmatmul.mubr.f32.gmra.mrb[0].mxu0 %v304
        %v397 = vpop.f32.mrb[0].mxu0
        %v398 = vadd.f32 %v265, %v397
        %v399 = vpop.f32.mrb[0].mxu0
        %400 = vmatprep.mubr.f32.mxu0 0.0
        %401 = vmatmul.mubr.f32.gmra.mrb[0].mxu0 %v307
        %v402 = vpop.f32.mrb[0].mxu0
        %v403 = vadd.f32 %v270, %v402
        %v404 = vpop.f32.mrb[0].mxu0
        %405 = vmatprep.mubr.f32.mxu0 0.0
        %406 = vmatmul.mubr.f32.gmra.mrb[0].mxu0 %v310
        %v407 = vpop.f32.mrb[0].mxu0
        %v408 = vadd.f32 %v275, %v407
        %v409 = vpop.f32.mrb[0].mxu0
        %410 = vmatprep.mubr.f32.mxu0 0.0
        %411 = vmatmul.mubr.f32.gmra.mrb[0].mxu0 %v313
        %v412 = vpop.f32.mrb[0].mxu0
        %v413 = vadd.f32 %v280, %v412
        %v414 = vpop.f32.mrb[0].mxu0
        %415 = vmatprep.mubr.f32.mxu0 0.0
        %416 = vmatmul.mubr.f32.gmra.mrb[0].mxu0 %v316
        %v417 = vpop.f32.mrb[0].mxu0
        %v418 = vadd.f32 %v285, %v417
        %v419 = vpop.f32.mrb[0].mxu0
        %420 = vmatprep.mubr.f32.mxu0 0.0
        %421 = vmatmul.mubr.f32.gmra.mrb[0].mxu0 %v319
        %v422 = vpop.f32.mrb[0].mxu0
        %v423 = vadd.f32 %v290, %v422
        %v424 = vpop.f32.mrb[0].mxu0
        %425 = vmatprep.mubr.f32.mxu0 0.0
        %426 = vmatmul.mubr.f32.gmra.mrb[0].mxu0 %v322
        %v427 = vpop.f32.mrb[0].mxu0
        %v428 = vadd.f32 %v295, %v427
        %v429 = vpop.f32.mrb[0].mxu0
        %430 = vmatprep.mubr.f32.mxu0 0.0
        %431 = vmatmul.mubr.f32.gmra.mrb[0].mxu0 %v325
        %v432 = vpop.f32.mrb[0].mxu0
        %v433 = vadd.f32 %v300, %v432
        %v434 = vpop.f32.mrb[0].mxu0
        %435 = vdwg.mxu0
        %vm436 = vcmask 523264
        %437 = vst.msk [vmem:[%s224] sm:$0xff] %vm436, %v398
        %438 = vst.msk [vmem:[%s224 + $0x8] sm:$0xff] %vm436, %v403
        %439 = vst.msk [vmem:[%s224 + $0x10] sm:$0xff] %vm436, %v408
        %440 = vst.msk [vmem:[%s224 + $0x18] sm:$0xff] %vm436, %v413
        %441 = vst.msk [vmem:[%s224 + $0x20] sm:$0xff] %vm436, %v418
        %442 = vst.msk [vmem:[%s224 + $0x28] sm:$0xff] %vm436, %v423
        %443 = vst.msk [vmem:[%s224 + $0x30] sm:$0xff] %vm436, %v428
        %444 = vst.msk [vmem:[%s224 + $0x38] sm:$0xff] %vm436, %v433
        %s445 = sand.u32 %s128, 1
        %s446 = scalar_lea.sflag [#allocation3], %s445
        %s447 = sand.u32 %s128, 1
        %s448 = smul.addr %s447, 64
        %s449 = scalar_lea.vmem [#allocation2], %s448
        // Predicated region
        $region33: #{tpu_custom_call.1} parent=31 // pred_check
          %p450 = pneg %p138
        $region34: #{tpu_custom_call.1} parent=31 // pred_check_branch
          %452 = sbr.rel (%p450) target = $region36
        $region35: #{tpu_custom_call.1} parent=31 // pred_region
          %s453 = smul.u32 8, %s24
          %s455 = ssub.s32 1024, 1024
          %456 = vsyncadd %s446, %s455
          %s457 = sadd.s32 %s23, %s453
          %s458 = smul.addr %s22, 8
          %s459 = sadd.s32 %s457, %s458
          %s460 = smul.addr %s459, 128
          %s461 = scalar_lea.hbm %s3, %s460
          %s462 = sshll.u32 %s449, 4
          %s463 = int_to_ptr.vmem [resolvable:$true] %s462
          %468 = dma.vmem_to_hbm [thread:$0]  %s463, 1024, %s461, %s446, 128, 128, 8
        $region36: #{tpu_custom_call.1} parent=31 // pred_fallthru
          _
      $region32: #{tpu_custom_call.1} parent=5 // pred_fallthru
        _
      %p469 = scmp.le.s32.totalorder 2, %s12
      // Predicated region
      $region37: #{tpu_custom_call.1} parent=5 // pred_check
        %p470 = pneg %p469
      $region38: #{tpu_custom_call.1} parent=5 // pred_check_branch
        %472 = sbr.rel (%p470) target = $region40
      $region39: #{tpu_custom_call.1} parent=5 // pred_region
        %s473 = ssub.s32 %s12, 2
        // Predicated region
        $region41: #{tpu_custom_call.1} parent=39 // pred_check
          %p474 = pneg %p144
        $region42: #{tpu_custom_call.1} parent=39 // pred_check_branch
          %476 = sbr.rel (%p474) target = $region44
        $region43: #{tpu_custom_call.1} parent=39 // pred_region
          %s477 = sand.u32 %s129, 1
          %s478 = scalar_lea.sflag [#allocation3], %s477
          %s479 = sand.u32 %s129, 1
          %s480 = smul.addr %s479, 64
          %s481 = scalar_lea.vmem [#allocation2], %s480
          %482 = dma.done %s478, 1024
        $region44: #{tpu_custom_call.1} parent=39 // pred_fallthru
          _
      $region40: #{tpu_custom_call.1} parent=5 // pred_fallthru
        _
    $region6: #{tpu_custom_call.1} parent=1 // loop_footer
      %s16 = sadd.s32 1, %s12
    $region7: #{tpu_custom_call.1} parent=1 // loop_footer_branch
      %11 = sbr.rel target = $region3
    $region8: #{tpu_custom_call.1} parent=1 // loop_exit
      _
    %483 = vsyncpa [#allocation3], 1
    %s484 = scalar_lea.sflag [#allocation3], 1
    %485 = vsyncpa %s484, 1

</llo_original>
